<compile_context>
chip_gen: v6e
topology: v6e:2x2x1
jax: 0.10.0
libtpu: 0.0.40
codegen_flags: <defaults>
</compile_context>

<pallas_src>
import functools

import jax
import jax.numpy as jnp
import numpy as np
from jax.experimental import pallas as pl
from jax.experimental.pallas import tpu as pltpu

BN_EPS = 1e-5


# ----------------------------------------------------------------------------- kernel
def _mlp_kernel(n_hidden, x_ref, *refs):
    """Pure matmul + ReLU chain (all BatchNorms folded into W/b offline).

    refs = (W_0, ..., W_{n_hidden-1}, W_out, bias_pack, out_ref)
      W_i       : [in_i, out_i]            f32, resident across the batch grid
      bias_pack : [n_hidden + 1, pack_w]   f32, row i = bias of layer i (zero padded)
      out_ref   : [tile_b, out_padded]     f32, lane-dense output block
    """
    w_refs = refs[:n_hidden + 1]
    b_pack_ref = refs[n_hidden + 1]
    out_ref = refs[n_hidden + 2]

    h = x_ref[...]
    for li in range(n_hidden):
        w = w_refs[li][...]
        width = w.shape[1]
        b = b_pack_ref[li:li + 1, :width]
        h = jnp.maximum(jnp.dot(h, w, preferred_element_type=jnp.float32) + b, 0.0)

    w_out = w_refs[n_hidden][...]
    out_padded = w_out.shape[1]
    b_out = b_pack_ref[n_hidden:n_hidden + 1, :out_padded]
    out_ref[...] = jnp.dot(h, w_out, preferred_element_type=jnp.float32) + b_out


# ----------------------------------------------------------------------------- folding
def _bn_scale_shift(p):
    # eval BN: y = x*s + t  with  s = gamma * rsqrt(var+eps),  t = beta - mean*s
    s = p["gamma"] * jax.lax.rsqrt(p["var"] + BN_EPS)
    t = p["beta"] - p["mean"] * s
    return s, t  # each [1, n]


def fold_params(params):
    """Fold every eval-mode BatchNorm into the adjacent Linear. Run once at prep time."""
    hidden = params["hidden"]
    n_hidden = len(hidden)

    ws, bs = [], []

    # continuous-feature BN -> continuous rows of the first Linear
    s_c, t_c = _bn_scale_shift(params["cont_bn"])
    n_cont = s_c.shape[1]
    W0, b0 = hidden[0]["w"], hidden[0]["b"]
    n_emb = W0.shape[0] - n_cont
    W0f = jnp.concatenate([W0[:n_emb], W0[n_emb:] * s_c[0][:, None]], axis=0)
    b0f = b0 + t_c @ W0[n_emb:]
    ws.append(W0f)
    bs.append(b0f)

    # hidden BN_i -> Linear_{i+1}   (BN follows the ReLU, so this folding is exact)
    for i in range(1, n_hidden):
        s, t = _bn_scale_shift(hidden[i - 1])
        W, b = hidden[i]["w"], hidden[i]["b"]
        ws.append(W * s[0][:, None])
        bs.append(b + t @ W)

    # last hidden BN -> out layer; pad out columns to a lane-dense multiple of 128
    s, t = _bn_scale_shift(hidden[-1])
    Wo, bo = params["out"]["w"], params["out"]["b"]
    Wof = Wo * s[0][:, None]
    bof = bo + t @ Wo
    out_size = Wo.shape[1]
    out_padded = ((out_size + 127) // 128) * 128
    pad = out_padded - out_size
    Wof = jnp.pad(Wof, ((0, 0), (0, pad)))
    bof = jnp.pad(bof, ((0, 0), (0, pad)))
    ws.append(Wof)
    bs.append(bof)

    # pack all biases into one array (one DMA instead of many tiny [1,N] inputs)
    pack_w = max(w.shape[1] for w in ws)
    bias_pack = jnp.concatenate(
        [jnp.pad(b, ((0, 0), (0, pack_w - b.shape[1]))) for b in bs], axis=0)

    return {
        "emb_tables": params["emb_tables"],
        "ws": ws,
        "bias_pack": bias_pack,
        "out_size": out_size,
    }


# ----------------------------------------------------------------------------- wrapper
def tabular_forward(x_cat_tokens, x_cont, folded):
    # glue: embedding gather + single concat (dropout is identity at inference)
    embs = [tbl[x_cat_tokens[:, i]] for i, tbl in enumerate(folded["emb_tables"])]
    x = jnp.concatenate(embs + [x_cont], axis=1).astype(jnp.float32)

    ws = folded["ws"]
    bias_pack = folded["bias_pack"]
    out_size = folded["out_size"]
    n_hidden = len(ws) - 1
    batch, feat = x.shape
    out_padded = ws[-1].shape[1]

    # 1-D batch grid; 256-row tiles keep VMEM bounded even on v5e's 16 MiB scoped default.
    tile_b = min(batch, 256)
    grid = (pl.cdiv(batch, tile_b),)

    kernel = functools.partial(_mlp_kernel, n_hidden)
    in_specs = [pl.BlockSpec((tile_b, feat), lambda i: (i, 0))]
    in_specs += [pl.BlockSpec(w.shape, lambda i: (0, 0)) for w in ws]
    in_specs += [pl.BlockSpec(bias_pack.shape, lambda i: (0, 0))]

    out = pl.pallas_call(
        kernel,
        out_shape=jax.ShapeDtypeStruct((batch, out_padded), jnp.float32),
        grid=grid,
        in_specs=in_specs,
        out_specs=pl.BlockSpec((tile_b, out_padded), lambda i: (i, 0)),
        compiler_params=pltpu.CompilerParams(
            dimension_semantics=("parallel",)),  # v7x: both TensorCores share the batch
    )(x, *ws, bias_pack)
    return out[:, :out_size]


# ----------------------------------------------------------------------------- params
def init_params(key, embedding_sizes, n_cont, layers, out_size):
    keys = iter(jax.random.split(key, 64))

    def normal(shape, scale=0.1):
        return (scale * jax.random.normal(next(keys), shape)).astype(jnp.float32)

    params = {}
    params["emb_tables"] = [normal((ni, nf)) for ni, nf in embedding_sizes]
    n_emb = sum(nf for _, nf in embedding_sizes)

    def bn_params(n):
        return {
            "gamma": (1.0 + normal((1, n))),
            "beta": normal((1, n)),
            "mean": normal((1, n)),
            "var": (0.5 + jnp.abs(normal((1, n), scale=0.5))),
        }

    params["cont_bn"] = bn_params(n_cont)

    hidden = []
    in_f = n_emb + n_cont
    for out_f in layers:
        layer = {"w": normal((in_f, out_f)), "b": normal((1, out_f))}
        layer.update(bn_params(out_f))
        hidden.append(layer)
        in_f = out_f
    params["hidden"] = hidden
    params["out"] = {"w": normal((in_f, out_size)), "b": normal((1, out_size))}
    return params


# ----------------------------------------------------------------------------- reference
def reference_forward(x_cat_tokens, x_cont, params):
    # plain-JAX replica of TabularModel.forward in eval mode (un-folded BN math)
    embs = [tbl[x_cat_tokens[:, i]] for i, tbl in enumerate(params["emb_tables"])]
    x_cat = jnp.concatenate(embs, axis=1).astype(jnp.float32)
    bn = params["cont_bn"]
    xc = (x_cont - bn["mean"]) * jax.lax.rsqrt(bn["var"] + BN_EPS) * bn["gamma"] + bn["beta"]
    h = jnp.concatenate([x_cat, xc], axis=1)
    for layer in params["hidden"]:
        h = jnp.maximum(h @ layer["w"] + layer["b"], 0.0)
        h = (h - layer["mean"]) * jax.lax.rsqrt(layer["var"] + BN_EPS) * layer["gamma"] + layer["beta"]
    return h @ params["out"]["w"] + params["out"]["b"]


# ----------------------------------------------------------------------------- main
if __name__ == "__main__":
    key = jax.random.PRNGKey(0)
    k_param, k_tok, k_cont = jax.random.split(key, 3)

    # small synthetic configuration consistent with TabularModel.fit/forward
    embedding_sizes = [(10, 4), (7, 3), (5, 1)]   # -> 8 embedding dims
    n_cont = 8                                    # continuous features
    layers = [32, 16]                             # hidden layer sizes
    out_size = 1                                  # regression head (no softmax)
    batch = 8

    params = init_params(k_param, embedding_sizes, n_cont, layers, out_size)
    folded = fold_params(params)                  # BN folding paid once at prep time

    tok_keys = jax.random.split(k_tok, len(embedding_sizes))
    x_cat_tokens = jnp.stack(
        [jax.random.randint(tk, (batch,), 0, ni) for tk, (ni, _) in zip(tok_keys, embedding_sizes)],
        axis=1,
    ).astype(jnp.int32)                           # [B, n_cat_features]
    x_cont = jax.random.normal(k_cont, (batch, n_cont), dtype=jnp.float32)

    out = tabular_forward(x_cat_tokens, x_cont, folded)
    out = jax.block_until_ready(out)

    ref = jax.block_until_ready(reference_forward(x_cat_tokens, x_cont, params))
    # folding reorders f32 ops (x @ (s*W) vs (x*s) @ W), so allow a few extra ulps
    np.testing.assert_allclose(np.asarray(out), np.asarray(ref), rtol=1e-4, atol=1e-5)

    # TODO(synk): dropout implemented as inference-mode identity (no RNG masking).
    print("KERNEL_OK")
</pallas_src>

<mosaic_0001>
module attributes {stable_mosaic.version = 11 : i64} {
  func.func @_mlp_kernel(%arg0: i32, %arg1: memref<8x16xf32, #tpu.memory_space<vmem>>, %arg2: memref<16x32xf32, #tpu.memory_space<vmem>>, %arg3: memref<32x16xf32, #tpu.memory_space<vmem>>, %arg4: memref<16x128xf32, #tpu.memory_space<vmem>>, %arg5: memref<3x128xf32, #tpu.memory_space<vmem>>, %arg6: memref<8x128xf32, #tpu.memory_space<vmem>>) attributes {dimension_semantics = [#tpu.dimension_semantics<parallel>], iteration_bounds = array<i64: 1>, scalar_prefetch = 0 : i64, scratch_operands = 0 : i64, tpu.core_type = #tpu.core_type<tc>, window_params = [{transform_indices = @transform_0, window_bounds = array<i64: 8, 16>}, {pipeline_mode = #tpu.pipeline_mode<synchronous>, transform_indices = @transform_1, window_bounds = array<i64: 16, 32>}, {pipeline_mode = #tpu.pipeline_mode<synchronous>, transform_indices = @transform_2, window_bounds = array<i64: 32, 16>}, {pipeline_mode = #tpu.pipeline_mode<synchronous>, transform_indices = @transform_3, window_bounds = array<i64: 16, 128>}, {pipeline_mode = #tpu.pipeline_mode<synchronous>, transform_indices = @transform_4, window_bounds = array<i64: 3, 128>}, {transform_indices = @transform_5, window_bounds = array<i64: 8, 128>}]} {
    %c0 = arith.constant 0 : index
    %c0_0 = arith.constant 0 : index
    %0 = vector.load %arg1[%c0, %c0_0] : memref<8x16xf32, #tpu.memory_space<vmem>>, vector<8x16xf32>
    %c0_1 = arith.constant 0 : index
    %c0_2 = arith.constant 0 : index
    %1 = vector.load %arg2[%c0_1, %c0_2] : memref<16x32xf32, #tpu.memory_space<vmem>>, vector<16x32xf32>
    %c0_3 = arith.constant 0 : index
    %c0_4 = arith.constant 0 : index
    %2 = vector.load %arg5[%c0_3, %c0_4] : memref<3x128xf32, #tpu.memory_space<vmem>>, vector<1x32xf32>
    %cst = arith.constant dense<0.000000e+00> : vector<8x32xf32>
    %3 = tpu.matmul %0, %1, %cst {dimension_numbers = #tpu.dot_dimension_numbers<[1], [0], [0], [1], [0, 0, 1, 1], [], []>} : vector<8x16xf32>, vector<16x32xf32>, vector<8x32xf32> -> vector<8x32xf32>
    %4 = vector.broadcast %2 : vector<1x32xf32> to vector<8x32xf32>
    %5 = arith.addf %3, %4 : vector<8x32xf32>
    %cst_5 = arith.constant 0.000000e+00 : f32
    %6 = vector.broadcast %cst_5 : f32 to vector<8x32xf32>
    %7 = arith.maximumf %5, %6 : vector<8x32xf32>
    %c0_6 = arith.constant 0 : index
    %c0_7 = arith.constant 0 : index
    %8 = vector.load %arg3[%c0_6, %c0_7] : memref<32x16xf32, #tpu.memory_space<vmem>>, vector<32x16xf32>
    %c1 = arith.constant 1 : index
    %c0_8 = arith.constant 0 : index
    %9 = vector.load %arg5[%c1, %c0_8] : memref<3x128xf32, #tpu.memory_space<vmem>>, vector<1x16xf32>
    %cst_9 = arith.constant dense<0.000000e+00> : vector<8x16xf32>
    %10 = tpu.matmul %7, %8, %cst_9 {dimension_numbers = #tpu.dot_dimension_numbers<[1], [0], [0], [1], [0, 0, 1, 1], [], []>} : vector<8x32xf32>, vector<32x16xf32>, vector<8x16xf32> -> vector<8x16xf32>
    %11 = vector.broadcast %9 : vector<1x16xf32> to vector<8x16xf32>
    %12 = arith.addf %10, %11 : vector<8x16xf32>
    %cst_10 = arith.constant 0.000000e+00 : f32
    %13 = vector.broadcast %cst_10 : f32 to vector<8x16xf32>
    %14 = arith.maximumf %12, %13 : vector<8x16xf32>
    %c0_11 = arith.constant 0 : index
    %c0_12 = arith.constant 0 : index
    %15 = vector.load %arg4[%c0_11, %c0_12] : memref<16x128xf32, #tpu.memory_space<vmem>>, vector<16x128xf32>
    %c2 = arith.constant 2 : index
    %c0_13 = arith.constant 0 : index
    %16 = vector.load %arg5[%c2, %c0_13] : memref<3x128xf32, #tpu.memory_space<vmem>>, vector<1x128xf32>
    %cst_14 = arith.constant dense<0.000000e+00> : vector<8x128xf32>
    %17 = tpu.matmul %14, %15, %cst_14 {dimension_numbers = #tpu.dot_dimension_numbers<[1], [0], [0], [1], [0, 0, 1, 1], [], []>} : vector<8x16xf32>, vector<16x128xf32>, vector<8x128xf32> -> vector<8x128xf32>
    %18 = vector.broadcast %16 : vector<1x128xf32> to vector<8x128xf32>
    %19 = arith.addf %17, %18 : vector<8x128xf32>
    %c0_15 = arith.constant 0 : index
    %c0_16 = arith.constant 0 : index
    %20 = vector.load %arg6[%c0_15, %c0_16] : memref<8x128xf32, #tpu.memory_space<vmem>>, vector<8x128xf32>
    tpu.vector_store %arg6[%c0_15, %c0_16], %19 {strides = array<i32>} : memref<8x128xf32, #tpu.memory_space<vmem>>, vector<8x128xf32>,
    return
  }
  func.func @transform_0(%arg0: i32) -> (i32, i32) {
    %c0_i32 = arith.constant 0 : i32
    %c0_i32_0 = arith.constant 0 : i32
    return %arg0, %c0_i32 : i32, i32
  }
  func.func @transform_1(%arg0: i32) -> (i32, i32) {
    %c0_i32 = arith.constant 0 : i32
    %c0_i32_0 = arith.constant 0 : i32
    %c0_i32_1 = arith.constant 0 : i32
    return %c0_i32, %c0_i32_0 : i32, i32
  }
  func.func @transform_2(%arg0: i32) -> (i32, i32) {
    %c0_i32 = arith.constant 0 : i32
    %c0_i32_0 = arith.constant 0 : i32
    %c0_i32_1 = arith.constant 0 : i32
    return %c0_i32, %c0_i32_0 : i32, i32
  }
  func.func @transform_3(%arg0: i32) -> (i32, i32) {
    %c0_i32 = arith.constant 0 : i32
    %c0_i32_0 = arith.constant 0 : i32
    %c0_i32_1 = arith.constant 0 : i32
    return %c0_i32, %c0_i32_0 : i32, i32
  }
  func.func @transform_4(%arg0: i32) -> (i32, i32) {
    %c0_i32 = arith.constant 0 : i32
    %c0_i32_0 = arith.constant 0 : i32
    %c0_i32_1 = arith.constant 0 : i32
    return %c0_i32, %c0_i32_0 : i32, i32
  }
  func.func @transform_5(%arg0: i32) -> (i32, i32) {
    %c0_i32 = arith.constant 0 : i32
    %c0_i32_0 = arith.constant 0 : i32
    return %arg0, %c0_i32 : i32, i32
  }
}

</mosaic_0001>

<llo_original>
// kernel: tpu_custom_call.1
$region0: #{tpu_custom_call.1}
  #allocation0 [shape = 'u32[]', space=smem, size = 0x4, offset = 0x4, fixed_abs, tag = 'smem constant byte address 0x4 - core index']
  #allocation1 [shape = 'u32[144,128]{1,0:T(1,128)}', space=vmem, size = 0x12000, scoped, tag = 'internal scratch']
  %s0 = inlined_call_operand.vmem [shape: f32[8,16], index: 0, kind: input, shape index: {}]
  %s1 = inlined_call_operand.vmem [shape: f32[16,32], index: 1, kind: input, shape index: {}]
  %s2 = inlined_call_operand.vmem [shape: f32[32,16], index: 2, kind: input, shape index: {}]
  %s3 = inlined_call_operand.vmem [shape: f32[16,128], index: 3, kind: input, shape index: {}]
  %s4 = inlined_call_operand.vmem [shape: f32[3,128], index: 4, kind: input, shape index: {}]
  %s5 = inlined_call_operand.hbm [shape: f32[8,128], index: 5, kind: output, shape index: {}]
  %s6 = sld [smem:[#allocation0]]
  $region30: #{tpu_custom_call.1} parent=0
    _
  %s8 = ssub.s32 1, %s6
  %s9 = scalar_select 0, %s8, %s6
  $region1: #{tpu_custom_call.1} parent=0
    #allocation2 [shape = 'u8[4096]{0}', space=vmem, size = 0x1000, scoped, tag = 'output window, operand 0, single buffered']
    #allocation3 [shape = 's32[1]{0}', space=sflag, size = 0x4, scoped, tag = 'scoped memory for tpu_custom_call.1']
    %10 = vsyncpa [#allocation3], 0
    // Predicated region
    $region2: #{tpu_custom_call.1} parent=1 // pred_check
      _
    $region3: #{tpu_custom_call.1} parent=1 // pred_check_branch
      %12 = sbr.rel (0) target = $region5
    $region4: #{tpu_custom_call.1} parent=1 // pred_region
      _
    $region5: #{tpu_custom_call.1} parent=1 // pred_fallthru
      _
    // Predicated region
    $region6: #{tpu_custom_call.1} parent=1 // pred_check
      _
    $region7: #{tpu_custom_call.1} parent=1 // pred_check_branch
      %14 = sbr.rel (0) target = $region9
    $region8: #{tpu_custom_call.1} parent=1 // pred_region
      _
    $region9: #{tpu_custom_call.1} parent=1 // pred_fallthru
      _
    // Predicated region
    $region10: #{tpu_custom_call.1} parent=1 // pred_check
      _
    $region11: #{tpu_custom_call.1} parent=1 // pred_check_branch
      %16 = sbr.rel (0) target = $region13
    $region12: #{tpu_custom_call.1} parent=1 // pred_region
      _
    $region13: #{tpu_custom_call.1} parent=1 // pred_fallthru
      _
    // Predicated region
    $region14: #{tpu_custom_call.1} parent=1 // pred_check
      _
    $region15: #{tpu_custom_call.1} parent=1 // pred_check_branch
      %18 = sbr.rel (0) target = $region17
    $region16: #{tpu_custom_call.1} parent=1 // pred_region
      _
    $region17: #{tpu_custom_call.1} parent=1 // pred_fallthru
      _
    // Predicated region
    $region18: #{tpu_custom_call.1} parent=1 // pred_check
      _
    $region19: #{tpu_custom_call.1} parent=1 // pred_check_branch
      %20 = sbr.rel (0) target = $region21
    $region20: #{tpu_custom_call.1} parent=1 // pred_region
      _
    $region21: #{tpu_custom_call.1} parent=1 // pred_fallthru
      _
    %v21 = vld [vmem:[%s0] sm:$0xff]
    %v22 = vld [vmem:[%s1] sm:$0xff]
    %v23 = vld [vmem:[%s1 + $0x8] sm:$0xff]
    %v24 = vld [vmem:[%s4] sm:$0x1]
    %v25 = vlaneseq
    %v26 = vshrl.u32 %v25, 7
    %v27 = vsub.s32 0, %v26
    %v28 = vrot.slane %v24, %v27
    %vm29 = vcmask 130048
    %v31 = vsel %vm29, %v21, 0
    %33 = vmatprep.subr.mxu0 0.0
    %34 = vmatpush1.msra.mxu0 0.0
    %35 = vmatprep.subr.mxu0 0.0
    %36 = vmatpush1.msra.mxu0 0.0
    %37 = vmatprep.subr.mxu0 0.0
    %38 = vmatpush1.msra.mxu0 0.0
    %39 = vmatprep.subr.mxu0 0.0
    %40 = vmatpush1.msra.mxu0 0.0
    %41 = vmatprep.subr.mxu0 0.0
    %42 = vmatpush1.msra.mxu0 0.0
    %43 = vmatprep.subr.mxu0 0.0
    %44 = vmatpush1.msra.mxu0 0.0
    %45 = vmatprep.subr.mxu0 0.0
    %46 = vmatpush1.msra.mxu0 0.0
    %47 = vmatprep.subr.mxu0 0.0
    %48 = vmatpush1.msra.mxu0 0.0
    %49 = vmatprep.subr.mxu0 0.0
    %50 = vmatpush1.msra.mxu0 0.0
    %51 = vmatprep.subr.mxu0 0.0
    %52 = vmatpush1.msra.mxu0 0.0
    %53 = vmatprep.subr.mxu0 0.0
    %54 = vmatpush1.msra.mxu0 0.0
    %55 = vmatprep.subr.mxu0 0.0
    %56 = vmatpush1.msra.mxu0 0.0
    %57 = vmatprep.subr.mxu0 0.0
    %58 = vmatpush1.msra.mxu0 0.0
    %59 = vmatprep.subr.mxu0 0.0
    %60 = vmatpush1.msra.mxu0 0.0
    %61 = vmatprep.subr.mxu0 0.0
    %62 = vmatpush1.msra.mxu0 %v23
    %63 = vmatprep.subr.mxu0 0.0
    %64 = vmatpush1.msra.mxu0 %v22
    %65 = vmatprep.subr.mxu0 0.0
    %66 = vmatpush2.msra.mxu0 0.0
    %67 = vmatprep.subr.mxu0 0.0
    %68 = vmatpush2.msra.mxu0 0.0
    %69 = vmatprep.subr.mxu0 0.0
    %70 = vmatpush2.msra.mxu0 0.0
    %71 = vmatprep.subr.mxu0 0.0
    %72 = vmatpush2.msra.mxu0 0.0
    %73 = vmatprep.subr.mxu0 0.0
    %74 = vmatpush2.msra.mxu0 0.0
    %75 = vmatprep.subr.mxu0 0.0
    %76 = vmatpush2.msra.mxu0 0.0
    %77 = vmatprep.subr.mxu0 0.0
    %78 = vmatpush2.msra.mxu0 0.0
    %79 = vmatprep.subr.mxu0 0.0
    %80 = vmatpush2.msra.mxu0 0.0
    %81 = vmatprep.subr.mxu0 0.0
    %82 = vmatpush2.msra.mxu0 0.0
    %83 = vmatprep.subr.mxu0 0.0
    %84 = vmatpush2.msra.mxu0 0.0
    %85 = vmatprep.subr.mxu0 0.0
    %86 = vmatpush2.msra.mxu0 0.0
    %87 = vmatprep.subr.mxu0 0.0
    %88 = vmatpush2.msra.mxu0 0.0
    %89 = vmatprep.subr.mxu0 0.0
    %90 = vmatpush2.msra.mxu0 0.0
    %91 = vmatprep.subr.mxu0 0.0
    %92 = vmatpush2.msra.mxu0 0.0
    %93 = vmatprep.subr.mxu0 0.0
    %94 = vmatpush2.msra.mxu0 0.0
    %95 = vmatprep.subr.mxu0 0.0
    %96 = vmatpush2.msra.mxu0 0.0
    %97 = vmatprep.mubr.f32.mxu0 0.0
    %98 = vmatmul.mubr.f32.gmra.mxu0 %v31
    %v99 = vpop.f32.mrf.mxu0
    %v100 = vadd.f32 %v28, %v99
    %v101 = vpop.f32.mrf.mxu0
    %102 = vdwg.mxu0
    %v103 = vmax.f32 %v100, 0.0
    %v104 = vld [vmem:[%s2] sm:$0xff]
    %v105 = vld [vmem:[%s2 + $0x8] sm:$0xff]
    %v106 = vld [vmem:[%s2 + $0x10] sm:$0xff]
    %v107 = vld [vmem:[%s2 + $0x18] sm:$0xff]
    %v108 = vld [vmem:[%s4 + $0x1] sm:$0x1]
    %v109 = vlaneseq
    %v110 = vshrl.u32 %v109, 7
    %v111 = vsub.s32 0, %v110
    %v112 = vrot.slane %v108, %v111
    %vm113 = vcmask 261120
    %v115 = vsel %vm113, %v103, 0
    %117 = vmatprep.subr.mxu0 0.0
    %118 = vmatpush1.msra.mxu0 0.0
    %119 = vmatprep.subr.mxu0 0.0
    %120 = vmatpush1.msra.mxu0 0.0
    %121 = vmatprep.subr.mxu0 0.0
    %122 = vmatpush1.msra.mxu0 0.0
    %123 = vmatprep.subr.mxu0 0.0
    %124 = vmatpush1.msra.mxu0 0.0
    %125 = vmatprep.subr.mxu0 0.0
    %126 = vmatpush1.msra.mxu0 0.0
    %127 = vmatprep.subr.mxu0 0.0
    %128 = vmatpush1.msra.mxu0 0.0
    %129 = vmatprep.subr.mxu0 0.0
    %130 = vmatpush1.msra.mxu0 0.0
    %131 = vmatprep.subr.mxu0 0.0
    %132 = vmatpush1.msra.mxu0 0.0
    %133 = vmatprep.subr.mxu0 0.0
    %134 = vmatpush1.msra.mxu0 0.0
    %135 = vmatprep.subr.mxu0 0.0
    %136 = vmatpush1.msra.mxu0 0.0
    %137 = vmatprep.subr.mxu0 0.0
    %138 = vmatpush1.msra.mxu0 0.0
    %139 = vmatprep.subr.mxu0 0.0
    %140 = vmatpush1.msra.mxu0 0.0
    %141 = vmatprep.subr.mxu0 0.0
    %142 = vmatpush1.msra.mxu0 %v107
    %143 = vmatprep.subr.mxu0 0.0
    %144 = vmatpush1.msra.mxu0 %v106
    %145 = vmatprep.subr.mxu0 0.0
    %146 = vmatpush1.msra.mxu0 %v105
    %147 = vmatprep.subr.mxu0 0.0
    %148 = vmatpush1.msra.mxu0 %v104
    %149 = vmatprep.subr.mxu0 0.0
    %150 = vmatpush2.msra.mxu0 0.0
    %151 = vmatprep.subr.mxu0 0.0
    %152 = vmatpush2.msra.mxu0 0.0
    %153 = vmatprep.subr.mxu0 0.0
    %154 = vmatpush2.msra.mxu0 0.0
    %155 = vmatprep.subr.mxu0 0.0
    %156 = vmatpush2.msra.mxu0 0.0
    %157 = vmatprep.subr.mxu0 0.0
    %158 = vmatpush2.msra.mxu0 0.0
    %159 = vmatprep.subr.mxu0 0.0
    %160 = vmatpush2.msra.mxu0 0.0
    %161 = vmatprep.subr.mxu0 0.0
    %162 = vmatpush2.msra.mxu0 0.0
    %163 = vmatprep.subr.mxu0 0.0
    %164 = vmatpush2.msra.mxu0 0.0
    %165 = vmatprep.subr.mxu0 0.0
    %166 = vmatpush2.msra.mxu0 0.0
    %167 = vmatprep.subr.mxu0 0.0
    %168 = vmatpush2.msra.mxu0 0.0
    %169 = vmatprep.subr.mxu0 0.0
    %170 = vmatpush2.msra.mxu0 0.0
    %171 = vmatprep.subr.mxu0 0.0
    %172 = vmatpush2.msra.mxu0 0.0
    %173 = vmatprep.subr.mxu0 0.0
    %174 = vmatpush2.msra.mxu0 0.0
    %175 = vmatprep.subr.mxu0 0.0
    %176 = vmatpush2.msra.mxu0 0.0
    %177 = vmatprep.subr.mxu0 0.0
    %178 = vmatpush2.msra.mxu0 0.0
    %179 = vmatprep.subr.mxu0 0.0
    %180 = vmatpush2.msra.mxu0 0.0
    %181 = vmatprep.mubr.f32.mxu0 0.0
    %182 = vmatmul.mubr.f32.gmra.mxu0 %v115
    %v183 = vpop.f32.mrf.mxu0
    %v184 = vadd.f32 %v112, %v183
    %v185 = vpop.f32.mrf.mxu0
    %186 = vdwg.mxu0
    %v187 = vmax.f32 %v184, 0.0
    %v188 = vld [vmem:[%s3] sm:$0xff]
    %v189 = vld [vmem:[%s3 + $0x8] sm:$0xff]
    %v190 = vld [vmem:[%s4 + $0x2] sm:$0x1]
    %v191 = vlaneseq
    %v192 = vshrl.u32 %v191, 7
    %v193 = vsub.s32 0, %v192
    %v194 = vrot.slane %v190, %v193
    %v196 = vsel %vm29, %v187, 0
    %198 = vmatprep.subr.mxu0 0.0
    %199 = vmatpush1.msra.mxu0 0.0
    %200 = vmatprep.subr.mxu0 0.0
    %201 = vmatpush1.msra.mxu0 0.0
    %202 = vmatprep.subr.mxu0 0.0
    %203 = vmatpush1.msra.mxu0 0.0
    %204 = vmatprep.subr.mxu0 0.0
    %205 = vmatpush1.msra.mxu0 0.0
    %206 = vmatprep.subr.mxu0 0.0
    %207 = vmatpush1.msra.mxu0 0.0
    %208 = vmatprep.subr.mxu0 0.0
    %209 = vmatpush1.msra.mxu0 0.0
    %210 = vmatprep.subr.mxu0 0.0
    %211 = vmatpush1.msra.mxu0 0.0
    %212 = vmatprep.subr.mxu0 0.0
    %213 = vmatpush1.msra.mxu0 0.0
    %214 = vmatprep.subr.mxu0 0.0
    %215 = vmatpush1.msra.mxu0 0.0
    %216 = vmatprep.subr.mxu0 0.0
    %217 = vmatpush1.msra.mxu0 0.0
    %218 = vmatprep.subr.mxu0 0.0
    %219 = vmatpush1.msra.mxu0 0.0
    %220 = vmatprep.subr.mxu0 0.0
    %221 = vmatpush1.msra.mxu0 0.0
    %222 = vmatprep.subr.mxu0 0.0
    %223 = vmatpush1.msra.mxu0 0.0
    %224 = vmatprep.subr.mxu0 0.0
    %225 = vmatpush1.msra.mxu0 0.0
    %226 = vmatprep.subr.mxu0 0.0
    %227 = vmatpush1.msra.mxu0 %v189
    %228 = vmatprep.subr.mxu0 0.0
    %229 = vmatpush1.msra.mxu0 %v188
    %230 = vmatprep.subr.mxu0 0.0
    %231 = vmatpush2.msra.mxu0 0.0
    %232 = vmatprep.subr.mxu0 0.0
    %233 = vmatpush2.msra.mxu0 0.0
    %234 = vmatprep.subr.mxu0 0.0
    %235 = vmatpush2.msra.mxu0 0.0
    %236 = vmatprep.subr.mxu0 0.0
    %237 = vmatpush2.msra.mxu0 0.0
    %238 = vmatprep.subr.mxu0 0.0
    %239 = vmatpush2.msra.mxu0 0.0
    %240 = vmatprep.subr.mxu0 0.0
    %241 = vmatpush2.msra.mxu0 0.0
    %242 = vmatprep.subr.mxu0 0.0
    %243 = vmatpush2.msra.mxu0 0.0
    %244 = vmatprep.subr.mxu0 0.0
    %245 = vmatpush2.msra.mxu0 0.0
    %246 = vmatprep.subr.mxu0 0.0
    %247 = vmatpush2.msra.mxu0 0.0
    %248 = vmatprep.subr.mxu0 0.0
    %249 = vmatpush2.msra.mxu0 0.0
    %250 = vmatprep.subr.mxu0 0.0
    %251 = vmatpush2.msra.mxu0 0.0
    %252 = vmatprep.subr.mxu0 0.0
    %253 = vmatpush2.msra.mxu0 0.0
    %254 = vmatprep.subr.mxu0 0.0
    %255 = vmatpush2.msra.mxu0 0.0
    %256 = vmatprep.subr.mxu0 0.0
    %257 = vmatpush2.msra.mxu0 0.0
    %258 = vmatprep.subr.mxu0 0.0
    %259 = vmatpush2.msra.mxu0 0.0
    %260 = vmatprep.subr.mxu0 0.0
    %261 = vmatpush2.msra.mxu0 0.0
    %262 = vmatprep.mubr.f32.mxu0 0.0
    %263 = vmatmul.mubr.f32.gmra.mxu0 %v196
    %v264 = vpop.f32.mrf.mxu0
    %v265 = vadd.f32 %v194, %v264
    %v266 = vpop.f32.mrf.mxu0
    %267 = vdwg.mxu0
    %268 = vst [vmem:[#allocation2] sm:$0xff] %v265
    // Predicated region
    $region22: #{tpu_custom_call.1} parent=1 // pred_check
      _
    $region23: #{tpu_custom_call.1} parent=1 // pred_check_branch
      %270 = sbr.rel (0) target = $region25
    $region24: #{tpu_custom_call.1} parent=1 // pred_region
      %s272 = ssub.s32 128, 128
      %273 = vsyncadd [#allocation3], %s272
      %s275 = sshll.u32 [#allocation2], 4
      %s276 = int_to_ptr.vmem [resolvable:$true] %s275
      %278 = dma.vmem_to_hbm [thread:$0]  %s276, 128, %s5, [#allocation3]
    $region25: #{tpu_custom_call.1} parent=1 // pred_fallthru
      _
    // Predicated region
    $region26: #{tpu_custom_call.1} parent=1 // pred_check
      _
    $region27: #{tpu_custom_call.1} parent=1 // pred_check_branch
      %280 = sbr.rel (0) target = $region29
    $region28: #{tpu_custom_call.1} parent=1 // pred_region
      %281 = dma.done [#allocation3], 128
    $region29: #{tpu_custom_call.1} parent=1 // pred_fallthru
      _
    %282 = vsyncpa [#allocation3], 1

</llo_original>
